<compile_context>
chip_gen: v6e
topology: v6e:2x2x1
jax: 0.10.0
libtpu: 0.0.40
codegen_flags: <defaults>
</compile_context>

<pallas_src>
import numpy as np
import jax
import jax.numpy as jnp
from jax.experimental import pallas as pl
from jax.experimental.pallas import tpu as pltpu


# ----------------- hyperparameters (CNN_fc.__init__ arguments) -----------------
INPUT_SIZE = 69
OUTPUT_SIZE = 5
NUM_KERNELS = 4
KERNEL_SIZE = 3
KERNEL_STEP = 1
DILATION = 2
BATCH = 2

DIL_LONG = int(DILATION / 2)

# derived sizes (same arithmetic as the PyTorch module)
LEN1 = (INPUT_SIZE - DILATION * (KERNEL_SIZE - 1) - 1) / KERNEL_STEP + 1
LEN2 = (INPUT_SIZE - DIL_LONG * (2 * KERNEL_SIZE - 1) - 1) / KERNEL_STEP + 1
WIDTH_RESULT = int(
    np.ceil((min(LEN1, LEN2) - 2 * NUM_KERNELS - 2) / (2 * NUM_KERNELS) + 1))

L1 = (INPUT_SIZE - DILATION * (KERNEL_SIZE - 1) - 1) // KERNEL_STEP + 1
L2 = (INPUT_SIZE - DIL_LONG * (2 * KERNEL_SIZE - 1) - 1) // KERNEL_STEP + 1
MIN_DIM = min(L1, L2)
TWO_NK = 2 * NUM_KERNELS
W_OUT = (MIN_DIM - TWO_NK) // TWO_NK + 1
# The PyTorch module is only runnable when the Linear in-features match the
# actual Conv2d output width; assert that our hyperparameter choice satisfies it.
assert W_OUT == WIDTH_RESULT, (W_OUT, WIDTH_RESULT)
USED_LEN = W_OUT * TWO_NK          # part of the concat output the Conv2d touches

# The fused taps must never read past the end of the input signal.
assert (KERNEL_SIZE - 1) * DILATION + (USED_LEN - 1) * KERNEL_STEP < INPUT_SIZE
assert (2 * KERNEL_SIZE - 1) * DIL_LONG + (USED_LEN - 1) * KERNEL_STEP < INPUT_SIZE


# ------------------------------- Pallas kernel ---------------------------------
def _cnn_fc_kernel(x_ref, wb_ref, out_ref):
    """Whole CNN_fc forward for all batches in one grid-less invocation.

    x_ref   : (B, INPUT_SIZE)          VMEM  input signal
    wb_ref  : (INPUT_SIZE + 1, OUT)    VMEM  fused network weight; last row = bias
    out_ref : (B, OUT)                 VMEM  result
    """
    x = x_ref[...]                                       # (B, IS)
    w = wb_ref[0:INPUT_SIZE, :]                          # (IS, OUT) fused affine map
    b = wb_ref[INPUT_SIZE:INPUT_SIZE + 1, :]             # (1,  OUT) fused bias
    # one MXU matmul + bias; torch.squeeze is a no-op on (B, OUT) for B >= 2
    out_ref[...] = jnp.dot(x, w, preferred_element_type=jnp.float32) + b


_COST = pl.CostEstimate(
    flops=2 * BATCH * INPUT_SIZE * OUTPUT_SIZE + BATCH * OUTPUT_SIZE,
    transcendentals=0,
    bytes_accessed=4 * (BATCH * INPUT_SIZE
                        + (INPUT_SIZE + 1) * OUTPUT_SIZE
                        + BATCH * OUTPUT_SIZE),
)


# ----------------- one-time parameter fusion (run at weight-load) ---------------
def fuse_params(params):
    """Fold the entire network into one affine map.

    Pure parameter algebra (no x involved); call ONCE when weights are loaded.
    Returns a single packed constant of shape (INPUT_SIZE + 1, OUTPUT_SIZE):
    rows [0, INPUT_SIZE) are W_total, row INPUT_SIZE is the fused bias.
    """
    ws, bs, wl, bl, w2, b2, wlin, blin = params

    # conv2d weight rows tiled along the width they slide over
    w2t = jnp.tile(w2, (1, W_OUT))                            # (2NK, USED_LEN)
    # contract conv1d channel weights against the conv2d rows they feed
    a_short = ws.T @ w2t[:NUM_KERNELS]                        # (KS,  USED_LEN)
    a_long = wl.T @ w2t[NUM_KERNELS:]                         # (2KS, USED_LEN)
    # conv2d stride-2NK window contracted with the linear weight:
    # w_fused[t, o] = wlin[o, t // 2NK]
    w_fused = jnp.repeat(wlin.T, TWO_NK, axis=0)              # (USED_LEN, OUT)

    # Scatter-add every tap's contribution into a single (INPUT_SIZE, OUT)
    # matrix: tap k of conv "a" at output position t reads input index
    # k*dil + t*stride and contributes a[k, t] * w_fused[t, :].
    def scatter_taps(w_total, a, dil):
        n_taps = a.shape[0]
        rows = (jnp.arange(n_taps)[:, None] * dil
                + jnp.arange(USED_LEN)[None, :] * KERNEL_STEP).reshape(-1)
        contrib = (a[:, :, None] * w_fused[None, :, :]).reshape(-1, OUTPUT_SIZE)
        return w_total.at[rows].add(contrib)

    w_total = jnp.zeros((INPUT_SIZE, OUTPUT_SIZE), jnp.float32)
    w_total = scatter_taps(w_total, a_short, DILATION)
    w_total = scatter_taps(w_total, a_long, DIL_LONG)

    # fold every bias (conv1d short/long, conv2d, linear) into one (1, OUT) row
    bias_cat = jnp.concatenate([bs, bl])                      # (2NK,)
    bias_fused = (blin
                  + b2 * jnp.sum(wlin, axis=1)
                  + bias_cat @ (w2t @ w_fused)
                  ).reshape(1, OUTPUT_SIZE)                   # (1, OUT)

    return jnp.concatenate([w_total, bias_fused], axis=0)     # (IS + 1, OUT)


# --------------------------------- forward --------------------------------------
def cnn_fc_forward(x, packed_wb):
    """x: (B, 1, INPUT_SIZE) float32 (PyTorch NCL layout). Returns (B, OUTPUT_SIZE).

    `packed_wb` is the output of `fuse_params` (computed once per weight set).
    """
    x2d = x[:, 0, :]                                          # glue: squeeze channel

    return pl.pallas_call(
        _cnn_fc_kernel,
        out_shape=jax.ShapeDtypeStruct((BATCH, OUTPUT_SIZE), jnp.float32),
        in_specs=[
            pl.BlockSpec(memory_space=pltpu.MemorySpace.VMEM),   # x
            pl.BlockSpec(memory_space=pltpu.MemorySpace.VMEM),   # packed W_total+bias
        ],
        out_specs=pl.BlockSpec(memory_space=pltpu.MemorySpace.VMEM),
        cost_estimate=_COST,
    )(x2d, packed_wb)


# ------------------------- pure-JAX reference (for check) ----------------------
def _ref_conv1d(x2d, w, bias, stride, dil):
    ksz = w.shape[1]
    length = (x2d.shape[1] - dil * (ksz - 1) - 1) // stride + 1
    cols = jnp.stack(
        [x2d[:, k * dil: k * dil + stride * (length - 1) + 1: stride]
         for k in range(ksz)], axis=-1)                       # (B, L, ksz)
    return jnp.einsum('blk,ck->bcl', cols, w) + bias[None, :, None]


def reference_forward(x, params):
    ws, bs, wl, bl, w2, b2, wlin, blin = params
    x2d = x[:, 0, :]
    x1 = _ref_conv1d(x2d, ws, bs, KERNEL_STEP, DILATION)
    x2 = _ref_conv1d(x2d, wl, bl, KERNEL_STEP, DIL_LONG)
    md = min(x1.shape[2], x2.shape[2])
    y = jnp.concatenate([x1[:, :, :md], x2[:, :, :md]], axis=1)   # (B, 2NK, md)
    y4 = y[:, :, :USED_LEN].reshape(BATCH, TWO_NK, W_OUT, TWO_NK)
    z = jnp.einsum('biwj,ij->bw', y4, w2) + b2                    # (B, W_OUT)
    return z @ wlin.T + blin                                      # (B, OUT)


# ------------------------------------ main --------------------------------------
if __name__ == "__main__":
    key = jax.random.PRNGKey(0)
    keys = jax.random.split(key, 9)

    def unif(k, shape, fan_in):
        bound = 1.0 / np.sqrt(fan_in)
        return jax.random.uniform(k, shape, jnp.float32, -bound, bound)

    # deterministic synthetic parameters (PyTorch-default-style uniform init)
    ws = unif(keys[0], (NUM_KERNELS, KERNEL_SIZE), KERNEL_SIZE)          # conv1d_short
    bs = unif(keys[1], (NUM_KERNELS,), KERNEL_SIZE)
    wl = unif(keys[2], (NUM_KERNELS, 2 * KERNEL_SIZE), 2 * KERNEL_SIZE)  # conv1d_long
    bl = unif(keys[3], (NUM_KERNELS,), 2 * KERNEL_SIZE)
    w2 = unif(keys[4], (TWO_NK, TWO_NK), TWO_NK * TWO_NK)                # conv2d (1->1)
    b2 = unif(keys[5], (), TWO_NK * TWO_NK)
    wlin = unif(keys[6], (OUTPUT_SIZE, WIDTH_RESULT), WIDTH_RESULT)      # linear
    blin = unif(keys[7], (OUTPUT_SIZE,), WIDTH_RESULT)
    params = (ws, bs, wl, bl, w2, b2, wlin, blin)

    x = jax.random.normal(keys[8], (BATCH, 1, INPUT_SIZE), jnp.float32)

    # one-time parameter fusion (hoisted out of the per-call path)
    packed_wb = jax.block_until_ready(fuse_params(params))

    out = cnn_fc_forward(x, packed_wb)
    out = jax.block_until_ready(out)

    ref = jax.block_until_ready(reference_forward(x, params))
    np.testing.assert_allclose(np.asarray(out), np.asarray(ref),
                               rtol=1e-5, atol=1e-4)

    print("KERNEL_OK")
</pallas_src>

<mosaic_0001>
module attributes {stable_mosaic.version = 11 : i64} {
  func.func @_cnn_fc_kernel(%arg0: memref<2x69xf32, #tpu.memory_space<vmem>>, %arg1: memref<70x5xf32, #tpu.memory_space<vmem>>, %arg2: memref<2x5xf32, #tpu.memory_space<vmem>>) attributes {dimension_semantics = [], scalar_prefetch = 0 : i64, scratch_operands = 0 : i64, tpu.core_type = #tpu.core_type<tc>} {
    %c0 = arith.constant 0 : index
    %c0_0 = arith.constant 0 : index
    %0 = vector.load %arg0[%c0, %c0_0] : memref<2x69xf32, #tpu.memory_space<vmem>>, vector<2x69xf32>
    %c0_1 = arith.constant 0 : index
    %c0_2 = arith.constant 0 : index
    %1 = vector.load %arg1[%c0_1, %c0_2] : memref<70x5xf32, #tpu.memory_space<vmem>>, vector<69x5xf32>
    %c69 = arith.constant 69 : index
    %c0_3 = arith.constant 0 : index
    %2 = vector.load %arg1[%c69, %c0_3] : memref<70x5xf32, #tpu.memory_space<vmem>>, vector<1x5xf32>
    %cst = arith.constant dense<0.000000e+00> : vector<2x5xf32>
    %3 = tpu.matmul %0, %1, %cst {dimension_numbers = #tpu.dot_dimension_numbers<[1], [0], [0], [1], [0, 0, 1, 1], [], []>} : vector<2x69xf32>, vector<69x5xf32>, vector<2x5xf32> -> vector<2x5xf32>
    %4 = vector.broadcast %2 : vector<1x5xf32> to vector<2x5xf32>
    %5 = arith.addf %3, %4 : vector<2x5xf32>
    %c0_4 = arith.constant 0 : index
    %c0_5 = arith.constant 0 : index
    %6 = vector.load %arg2[%c0_4, %c0_5] : memref<2x5xf32, #tpu.memory_space<vmem>>, vector<2x5xf32>
    tpu.vector_store %arg2[%c0_4, %c0_5], %5 {strides = array<i32>} : memref<2x5xf32, #tpu.memory_space<vmem>>, vector<2x5xf32>,
    return
  }
}

</mosaic_0001>

<llo_original>
// kernel: tpu_custom_call.1
$region0: #{tpu_custom_call.1}
  #allocation0 [shape = 'u32[]', space=smem, size = 0x4, offset = 0x4, fixed_abs, tag = 'smem constant byte address 0x4 - core index']
  #allocation1 [shape = 'u32[144,128]{1,0:T(1,128)}', space=vmem, size = 0x12000, scoped, tag = 'internal scratch']
  %s0 = inlined_call_operand.vmem [shape: f32[2,69], index: 0, kind: input, shape index: {}]
  %s1 = inlined_call_operand.vmem [shape: f32[70,5], index: 1, kind: input, shape index: {}]
  %s2 = inlined_call_operand.hbm [shape: f32[2,5], index: 2, kind: output, shape index: {}]
  %s3 = sld [smem:[#allocation0]]
  $region18: #{tpu_custom_call.1} parent=0
    _
  %s5 = ssub.s32 1, %s3
  %s6 = scalar_select 0, %s5, %s3
  $region1: #{tpu_custom_call.1} parent=0
    #allocation2 [shape = 'u8[1024]{0}', space=vmem, size = 0x400, scoped, tag = 'output window, operand 0, single buffered']
    #allocation3 [shape = 's32[1]{0}', space=sflag, size = 0x4, scoped, tag = 'scoped memory for tpu_custom_call.1']
    %7 = vsyncpa [#allocation3], 0
    // Predicated region
    $region2: #{tpu_custom_call.1} parent=1 // pred_check
      _
    $region3: #{tpu_custom_call.1} parent=1 // pred_check_branch
      %9 = sbr.rel (0) target = $region5
    $region4: #{tpu_custom_call.1} parent=1 // pred_region
      _
    $region5: #{tpu_custom_call.1} parent=1 // pred_fallthru
      _
    // Predicated region
    $region6: #{tpu_custom_call.1} parent=1 // pred_check
      _
    $region7: #{tpu_custom_call.1} parent=1 // pred_check_branch
      %11 = sbr.rel (0) target = $region9
    $region8: #{tpu_custom_call.1} parent=1 // pred_region
      _
    $region9: #{tpu_custom_call.1} parent=1 // pred_fallthru
      _
    %v12 = vld [vmem:[%s0] sm:$0x3]
    %v13 = vld [vmem:[%s1] sm:$0xff]
    %v14 = vld [vmem:[%s1 + $0x8] sm:$0xff]
    %v15 = vld [vmem:[%s1 + $0x10] sm:$0xff]
    %v16 = vld [vmem:[%s1 + $0x18] sm:$0xff]
    %v17 = vld [vmem:[%s1 + $0x20] sm:$0xff]
    %v18 = vld [vmem:[%s1 + $0x28] sm:$0xff]
    %v19 = vld [vmem:[%s1 + $0x30] sm:$0xff]
    %v20 = vld [vmem:[%s1 + $0x38] sm:$0xff]
    %v21 = vld [vmem:[%s1 + $0x40] sm:$0x1f]
    %v22 = vld [vmem:[%s1 + $0x45] sm:$0x1]
    %v23 = vlaneseq
    %v24 = vshrl.u32 %v23, 7
    %v25 = vsub.s32 0, %v24
    %v26 = vrot.slane %v22, %v25
    %vm27 = vcmask 564224
    %v29 = vsel %vm27, %v12, 0
    %vm31 = vcmask 1044480
    %v33 = vsel %vm31, %v21, 0
    %35 = vmatprep.subr.mxu0 0.0
    %36 = vmatpush1.msra.mxu0 0.0
    %37 = vmatprep.subr.mxu0 0.0
    %38 = vmatpush1.msra.mxu0 0.0
    %39 = vmatprep.subr.mxu0 0.0
    %40 = vmatpush1.msra.mxu0 0.0
    %41 = vmatprep.subr.mxu0 0.0
    %42 = vmatpush1.msra.mxu0 0.0
    %43 = vmatprep.subr.mxu0 0.0
    %44 = vmatpush1.msra.mxu0 0.0
    %45 = vmatprep.subr.mxu0 0.0
    %46 = vmatpush1.msra.mxu0 0.0
    %47 = vmatprep.subr.mxu0 0.0
    %48 = vmatpush1.msra.mxu0 0.0
    %49 = vmatprep.subr.mxu0 0.0
    %50 = vmatpush1.msra.mxu0 %v33
    %51 = vmatprep.subr.mxu0 0.0
    %52 = vmatpush1.msra.mxu0 %v20
    %53 = vmatprep.subr.mxu0 0.0
    %54 = vmatpush1.msra.mxu0 %v19
    %55 = vmatprep.subr.mxu0 0.0
    %56 = vmatpush1.msra.mxu0 %v18
    %57 = vmatprep.subr.mxu0 0.0
    %58 = vmatpush1.msra.mxu0 %v17
    %59 = vmatprep.subr.mxu0 0.0
    %60 = vmatpush1.msra.mxu0 %v16
    %61 = vmatprep.subr.mxu0 0.0
    %62 = vmatpush1.msra.mxu0 %v15
    %63 = vmatprep.subr.mxu0 0.0
    %64 = vmatpush1.msra.mxu0 %v14
    %65 = vmatprep.subr.mxu0 0.0
    %66 = vmatpush1.msra.mxu0 %v13
    %67 = vmatprep.subr.mxu0 0.0
    %68 = vmatpush2.msra.mxu0 0.0
    %69 = vmatprep.subr.mxu0 0.0
    %70 = vmatpush2.msra.mxu0 0.0
    %71 = vmatprep.subr.mxu0 0.0
    %72 = vmatpush2.msra.mxu0 0.0
    %73 = vmatprep.subr.mxu0 0.0
    %74 = vmatpush2.msra.mxu0 0.0
    %75 = vmatprep.subr.mxu0 0.0
    %76 = vmatpush2.msra.mxu0 0.0
    %77 = vmatprep.subr.mxu0 0.0
    %78 = vmatpush2.msra.mxu0 0.0
    %79 = vmatprep.subr.mxu0 0.0
    %80 = vmatpush2.msra.mxu0 0.0
    %81 = vmatprep.subr.mxu0 0.0
    %82 = vmatpush2.msra.mxu0 0.0
    %83 = vmatprep.subr.mxu0 0.0
    %84 = vmatpush2.msra.mxu0 0.0
    %85 = vmatprep.subr.mxu0 0.0
    %86 = vmatpush2.msra.mxu0 0.0
    %87 = vmatprep.subr.mxu0 0.0
    %88 = vmatpush2.msra.mxu0 0.0
    %89 = vmatprep.subr.mxu0 0.0
    %90 = vmatpush2.msra.mxu0 0.0
    %91 = vmatprep.subr.mxu0 0.0
    %92 = vmatpush2.msra.mxu0 0.0
    %93 = vmatprep.subr.mxu0 0.0
    %94 = vmatpush2.msra.mxu0 0.0
    %95 = vmatprep.subr.mxu0 0.0
    %96 = vmatpush2.msra.mxu0 0.0
    %97 = vmatprep.subr.mxu0 0.0
    %98 = vmatpush2.msra.mxu0 0.0
    %99 = vmatprep.mubr.f32.mxu0 0.0
    %100 = vmatmul.mubr.f32.gmra.mxu0 %v29
    %v101 = vpop.f32.mrf.mxu0
    %v102 = vadd.f32 %v26, %v101
    %v103 = vpop.f32.mrf.mxu0
    %104 = vdwg.mxu0
    %vm105 = vcmask 33792
    %106 = vst.msk [vmem:[#allocation2] sm:$0x3] %vm105, %v102
    // Predicated region
    $region10: #{tpu_custom_call.1} parent=1 // pred_check
      _
    $region11: #{tpu_custom_call.1} parent=1 // pred_check_branch
      %108 = sbr.rel (0) target = $region13
    $region12: #{tpu_custom_call.1} parent=1 // pred_region
      %s110 = ssub.s32 32, 32
      %111 = vsyncadd [#allocation3], %s110
      %s113 = sshll.u32 [#allocation2], 4
      %s114 = int_to_ptr.vmem [resolvable:$true] %s113
      %116 = dma.vmem_to_hbm [thread:$0]  %s114, 32, %s2, [#allocation3]
    $region13: #{tpu_custom_call.1} parent=1 // pred_fallthru
      _
    // Predicated region
    $region14: #{tpu_custom_call.1} parent=1 // pred_check
      _
    $region15: #{tpu_custom_call.1} parent=1 // pred_check_branch
      %118 = sbr.rel (0) target = $region17
    $region16: #{tpu_custom_call.1} parent=1 // pred_region
      %119 = dma.done [#allocation3], 32
    $region17: #{tpu_custom_call.1} parent=1 // pred_fallthru
      _
    %120 = vsyncpa [#allocation3], 1

</llo_original>
